<compile_context>
chip_gen: v7x
topology: tpu7x:2x2x1
jax: 0.10.0
libtpu: 0.0.40
codegen_flags: <defaults>
</compile_context>

<pallas_src>
import functools

import jax
import jax.numpy as jnp
import numpy as np
from jax.experimental import pallas as pl
from jax.experimental.pallas import tpu as pltpu


def _round_up(x, m):
    return (x + m - 1) // m * m


# --------------------------------------------------------------------------- #
# Kernel
# --------------------------------------------------------------------------- #
def _enhanced_server_kernel(x_ref, vec_ref, wexp_ref, *rest_refs,
                            hidden_dims, hidden_pads, t_pad, nc_pad):
    """Processes one batch tile.

    x_ref    : [TILE_B, CHW_pad]    f32/bf16  flattened NCHW input rows (lane-padded)
    vec_ref  : [R, MAXD]            f32       packed (1, N) parameter vectors
    wexp_ref : [CHW_pad, T_pad]     bf16      fused avg-pool + projection weight
    rest     : W_0..W_{nh-1} (bf16, lane/row padded), W_final (bf16), out_ref
    """
    out_ref = rest_refs[-1]
    wf_ref = rest_refs[-2]
    w_refs = rest_refs[:-2]

    vp = vec_ref[...]                                        # [R, MAXD] f32

    # ---- fused global average pool + AdaptiveFeatureProjection Linear ----
    # feat[b, c] = mean_hw x[b, c, hw];  h = feat @ proj_w  ==  x_flat @ (proj_w/HW expanded)
    xb = x_ref[...].astype(jnp.bfloat16)                     # [TILE_B, CHW_pad]
    h = jnp.dot(xb, wexp_ref[...],
                preferred_element_type=jnp.float32)          # [TILE_B, T_pad] f32
    h = h + vp[0:1, :t_pad]

    # ---- BatchNorm1d (eval mode: running stats) + LeakyReLU(0.1) ----
    gamma, beta = vp[1:2, :t_pad], vp[2:3, :t_pad]
    bn_mean, bn_var = vp[3:4, :t_pad], vp[4:5, :t_pad]
    h = (h - bn_mean) * jax.lax.rsqrt(bn_var + 1e-5) * gamma + beta
    h = jnp.where(h > 0, h, 0.1 * h)                         # LeakyReLU(0.1)
    # Dropout(0.3): identity in eval mode.

    # ---- UnifiedClassifier hidden blocks: Linear -> LayerNorm -> ReLU (-> Dropout) ----
    row = 5
    for i in range(len(hidden_dims)):
        d, d_pad = hidden_dims[i], hidden_pads[i]
        h = jnp.dot(h.astype(jnp.bfloat16), w_refs[i][...],
                    preferred_element_type=jnp.float32) + vp[row:row + 1, :d_pad]
        # LayerNorm over the TRUE width d (padded lanes of h are exactly zero, so
        # the sums are unaffected; zero-padded gamma/beta keep pad lanes at 0).
        inv_d = 1.0 / float(d)
        s = jnp.sum(h, axis=-1, keepdims=True)
        ss = jnp.sum(h * h, axis=-1, keepdims=True)
        mu = s * inv_d
        var_ln = jnp.maximum(ss * inv_d - mu * mu, 0.0)
        h = (h - mu) * jax.lax.rsqrt(var_ln + 1e-5) * vp[row + 1:row + 2, :d_pad] \
            + vp[row + 2:row + 3, :d_pad]
        h = jnp.maximum(h, 0.0)
        row += 3
        # Dropout(0.5): identity in eval mode.

    # ---- final Linear (lane-padded to nc_pad -> dense, unmasked output store) ----
    logits = jnp.dot(h.astype(jnp.bfloat16), wf_ref[...],
                     preferred_element_type=jnp.float32) + vp[row:row + 1, :nc_pad]
    out_ref[...] = logits.astype(out_ref.dtype)


# --------------------------------------------------------------------------- #
# Wrapper
# --------------------------------------------------------------------------- #
def _resident_spec(shape):
    nd = len(shape)
    return pl.BlockSpec(shape, lambda b, _nd=nd: (0,) * _nd)


def _vmem_budgets():
    """(x_tile_budget_bytes, vmem_limit_bytes), generation-aware."""
    try:
        cap = pltpu.get_tpu_info().vmem_capacity_bytes
    except Exception:
        cap = 64 << 20                       # conservative: v7x per-TensorCore VMEM
    if cap >= (96 << 20):                    # v5e / v6e: 128 MiB VMEM
        return 40 << 20, 100 << 20
    return 24 << 20, 48 << 20                # v7x: 64 MiB physical, leave headroom


def _choose_tile_b(batch, chw_pad, itemsize, x_budget_bytes):
    """Batch tile: multiple of 8, double-buffered x tile fits the budget, and
    at least 2 grid steps when the (padded) batch is >= 16 (v7x megacore)."""
    per_row = max(1, chw_pad * itemsize)
    tile = x_budget_bytes // (2 * per_row)   # x tile is double-buffered
    tile = max(8, (tile // 8) * 8)
    b8 = _round_up(batch, 8)
    if b8 >= 16:
        tile = min(tile, max(8, (b8 // 2) // 8 * 8))
    return int(min(tile, b8))


def enhanced_server_forward(x, params):
    """x: [B, C, H, W] (NCHW, f32 or bf16). Returns logits [B, num_classes] f32."""
    B, C, H, W = x.shape
    HW = H * W
    CHW = C * HW

    proj_w = params["proj_w"]                    # [C, target_dim]
    assert proj_w.shape[0] == C, "input_dim must equal channel count after pooling"
    target_dim = proj_w.shape[1]
    hidden = params["hidden"]                    # list of (W, b, ln_gamma, ln_beta)
    hidden_dims = tuple(int(w.shape[1]) for (w, _, _, _) in hidden)
    num_hidden = len(hidden)
    num_classes = params["final_w"].shape[1]

    t_pad = _round_up(target_dim, 128)
    nc_pad = _round_up(num_classes, 128)
    hidden_pads = tuple(_round_up(d, 128) for d in hidden_dims)
    maxd = max((t_pad, nc_pad) + hidden_pads)
    chw_pad = _round_up(CHW, 128)

    x_budget, vmem_limit = _vmem_budgets()
    tile_b = _choose_tile_b(B, chw_pad, jnp.dtype(x.dtype).itemsize, x_budget)
    b_pad = _round_up(B, tile_b)

    # ---- x slab [B_pad, CHW_pad]: free row-major collapse + zero pad (keeps dtype) ----
    x2 = x.reshape(B, CHW)
    if b_pad != B or chw_pad != CHW:
        x2 = jnp.pad(x2, ((0, b_pad - B), (0, chw_pad - CHW)))

    # ---- pack every (1, N) parameter vector into one array -> single DMA ----
    n_rows = 5 + 3 * num_hidden + 1
    vec = jnp.zeros((n_rows, maxd), jnp.float32)
    vec = vec.at[0, :target_dim].set(params["proj_b"].reshape(-1))
    vec = vec.at[1, :target_dim].set(params["bn_gamma"].reshape(-1))
    vec = vec.at[2, :target_dim].set(params["bn_beta"].reshape(-1))
    vec = vec.at[3, :target_dim].set(params["bn_mean"].reshape(-1))
    vec = vec.at[4, :].set(1.0)                       # padded BN var -> 1 (keeps pads at 0)
    vec = vec.at[4, :target_dim].set(params["bn_var"].reshape(-1))
    row = 5
    for (w, b, g, beta) in hidden:
        d = w.shape[1]
        vec = vec.at[row, :d].set(b.reshape(-1))
        vec = vec.at[row + 1, :d].set(g.reshape(-1))
        vec = vec.at[row + 2, :d].set(beta.reshape(-1))
        row += 3
    vec = vec.at[row, :num_classes].set(params["final_b"].reshape(-1))

    # ---- fused avg-pool + projection weight: W_exp[c*HW+hw, t] = proj_w[c, t]/HW ----
    w_exp = jnp.repeat(proj_w.astype(jnp.float32), HW, axis=0) / float(HW)   # [CHW, T]
    w_exp = jnp.pad(w_exp, ((0, chw_pad - CHW), (0, t_pad - target_dim)))
    w_exp = w_exp.astype(jnp.bfloat16)

    # ---- lane/row padded bf16 weights (bf16 x bf16 -> f32 MXU path in-kernel) ----
    hidden_ws = []
    prev_real, prev_pad = target_dim, t_pad
    for li, (w, _, _, _) in enumerate(hidden):
        d, d_pad = hidden_dims[li], hidden_pads[li]
        w_p = jnp.pad(w.astype(jnp.float32),
                      ((0, prev_pad - prev_real), (0, d_pad - d))).astype(jnp.bfloat16)
        hidden_ws.append(w_p)
        prev_real, prev_pad = d, d_pad
    wf = jnp.pad(params["final_w"].astype(jnp.float32),
                 ((0, prev_pad - prev_real), (0, nc_pad - num_classes))
                 ).astype(jnp.bfloat16)

    inputs = [x2, vec, w_exp, *hidden_ws, wf]

    kernel = functools.partial(
        _enhanced_server_kernel,
        hidden_dims=hidden_dims, hidden_pads=hidden_pads, t_pad=t_pad, nc_pad=nc_pad)

    in_specs = [pl.BlockSpec((tile_b, chw_pad), lambda b: (b, 0))] + \
               [_resident_spec(a.shape) for a in inputs[1:]]
    out_specs = pl.BlockSpec((tile_b, nc_pad), lambda b: (b, 0))
    grid = (b_pad // tile_b,)

    # ---- advisory cost estimate for the XLA scheduler ----
    dims_chain = [chw_pad, t_pad] + list(hidden_pads) + [nc_pad]
    mm_flops = 2 * b_pad * sum(dims_chain[i] * dims_chain[i + 1]
                               for i in range(len(dims_chain) - 1))
    bytes_accessed = int(x2.size * jnp.dtype(x2.dtype).itemsize
                         + vec.size * 4
                         + sum(w.size * 2 for w in [w_exp, *hidden_ws, wf])
                         + b_pad * nc_pad * 4)
    cost = pl.CostEstimate(flops=int(mm_flops),
                           transcendentals=int(b_pad * (1 + num_hidden)),
                           bytes_accessed=bytes_accessed)

    out = pl.pallas_call(
        kernel,
        grid=grid,
        in_specs=in_specs,
        out_specs=out_specs,
        out_shape=jax.ShapeDtypeStruct((b_pad, nc_pad), jnp.float32),
        compiler_params=pltpu.CompilerParams(
            dimension_semantics=("parallel",),
            vmem_limit_bytes=vmem_limit),
        cost_estimate=cost,
    )(*inputs)

    return out[:B, :num_classes]


# --------------------------------------------------------------------------- #
# Pure-JAX reference (mirrors the kernel's bf16 operand rounding) + parameters
# --------------------------------------------------------------------------- #
def reference_forward(x, params):
    bf = jnp.bfloat16
    B, C, H, W = x.shape
    HW = H * W
    w_exp = jnp.repeat(params["proj_w"].astype(jnp.float32), HW, axis=0) / float(HW)
    h = jnp.dot(x.reshape(B, C * HW).astype(bf), w_exp.astype(bf),
                preferred_element_type=jnp.float32) + params["proj_b"][None, :]
    h = (h - params["bn_mean"][None, :]) * jax.lax.rsqrt(params["bn_var"][None, :] + 1e-5) \
        * params["bn_gamma"][None, :] + params["bn_beta"][None, :]
    h = jnp.where(h > 0, h, 0.1 * h)
    for (w, b, g, beta) in params["hidden"]:
        h = jnp.dot(h.astype(bf), w.astype(bf),
                    preferred_element_type=jnp.float32) + b[None, :]
        mu = h.mean(-1, keepdims=True)
        vr = jnp.square(h - mu).mean(-1, keepdims=True)
        h = (h - mu) * jax.lax.rsqrt(vr + 1e-5) * g[None, :] + beta[None, :]
        h = jnp.maximum(h, 0.0)
    return jnp.dot(h.astype(bf), params["final_w"].astype(bf),
                   preferred_element_type=jnp.float32) + params["final_b"][None, :]


def init_params(key, input_dim, target_dim, hidden_dims, num_classes):
    """Deterministic synthetic parameters (shapes match the PyTorch module)."""
    keys = jax.random.split(key, 8 + 5 * len(hidden_dims))
    k = iter(keys)
    params = {
        "proj_w": jax.random.normal(next(k), (input_dim, target_dim), jnp.float32)
                  / jnp.sqrt(float(input_dim)),
        "proj_b": 0.1 * jax.random.normal(next(k), (target_dim,), jnp.float32),
        "bn_gamma": 1.0 + 0.1 * jax.random.normal(next(k), (target_dim,), jnp.float32),
        "bn_beta": 0.1 * jax.random.normal(next(k), (target_dim,), jnp.float32),
        "bn_mean": 0.1 * jax.random.normal(next(k), (target_dim,), jnp.float32),
        "bn_var": 0.5 + jax.random.uniform(next(k), (target_dim,), jnp.float32),
    }
    hidden = []
    prev = target_dim
    for dim in hidden_dims:
        w = jax.random.normal(next(k), (prev, dim), jnp.float32) * jnp.sqrt(2.0 / dim)
        b = 0.1 * jax.random.normal(next(k), (dim,), jnp.float32)
        g = 1.0 + 0.1 * jax.random.normal(next(k), (dim,), jnp.float32)
        beta = 0.1 * jax.random.normal(next(k), (dim,), jnp.float32)
        hidden.append((w, b, g, beta))
        prev = dim
    params["hidden"] = hidden
    params["final_w"] = jax.random.normal(next(k), (prev, num_classes), jnp.float32) \
                        * jnp.sqrt(2.0 / num_classes)
    params["final_b"] = 0.1 * jax.random.normal(next(k), (num_classes,), jnp.float32)
    return params


if __name__ == "__main__":
    B, C, H, W = 2, 4, 16, 16          # x: [2, 4, 16, 16] (NCHW)
    input_dim = C                      # features after global avg pool have C dims
    target_dim = 32
    hidden_dims = [64, 32]
    num_classes = 10

    key = jax.random.PRNGKey(0)
    kx, kp = jax.random.split(key)
    x = jax.random.normal(kx, (B, C, H, W), jnp.float32)
    params = init_params(kp, input_dim, target_dim, hidden_dims, num_classes)

    logits = enhanced_server_forward(x, params)
    jax.block_until_ready(logits)
    assert logits.shape == (B, num_classes)

    ref = reference_forward(x, params)
    np.testing.assert_allclose(np.asarray(logits), np.asarray(ref), rtol=2e-2, atol=2e-2)

    print("KERNEL_OK")
</pallas_src>

<mosaic_0001>
module attributes {stable_mosaic.version = 11 : i64} {
  func.func @_enhanced_server_kernel(%arg0: i32, %arg1: memref<8x1024xf32, #tpu.memory_space<vmem>>, %arg2: memref<12x128xf32, #tpu.memory_space<vmem>>, %arg3: memref<1024x128xbf16, #tpu.memory_space<vmem>>, %arg4: memref<128x128xbf16, #tpu.memory_space<vmem>>, %arg5: memref<128x128xbf16, #tpu.memory_space<vmem>>, %arg6: memref<128x128xbf16, #tpu.memory_space<vmem>>, %arg7: memref<8x128xf32, #tpu.memory_space<vmem>>) attributes {dimension_semantics = [#tpu.dimension_semantics<parallel>], iteration_bounds = array<i64: 1>, scalar_prefetch = 0 : i64, scratch_operands = 0 : i64, tpu.core_type = #tpu.core_type<tc>, window_params = [{transform_indices = @transform_0, window_bounds = array<i64: 8, 1024>}, {pipeline_mode = #tpu.pipeline_mode<synchronous>, transform_indices = @transform_1, window_bounds = array<i64: 12, 128>}, {pipeline_mode = #tpu.pipeline_mode<synchronous>, transform_indices = @transform_2, window_bounds = array<i64: 1024, 128>}, {pipeline_mode = #tpu.pipeline_mode<synchronous>, transform_indices = @transform_3, window_bounds = array<i64: 128, 128>}, {pipeline_mode = #tpu.pipeline_mode<synchronous>, transform_indices = @transform_4, window_bounds = array<i64: 128, 128>}, {pipeline_mode = #tpu.pipeline_mode<synchronous>, transform_indices = @transform_5, window_bounds = array<i64: 128, 128>}, {transform_indices = @transform_6, window_bounds = array<i64: 8, 128>}]} {
    %c0 = arith.constant 0 : index
    %c0_0 = arith.constant 0 : index
    %0 = vector.load %arg2[%c0, %c0_0] : memref<12x128xf32, #tpu.memory_space<vmem>>, vector<12x128xf32>
    %c0_1 = arith.constant 0 : index
    %c0_2 = arith.constant 0 : index
    %1 = vector.load %arg1[%c0_1, %c0_2] : memref<8x1024xf32, #tpu.memory_space<vmem>>, vector<8x1024xf32>
    %2 = arith.truncf %1 : vector<8x1024xf32> to vector<8x1024xbf16>
    %c0_3 = arith.constant 0 : index
    %c0_4 = arith.constant 0 : index
    %3 = vector.load %arg3[%c0_3, %c0_4] : memref<1024x128xbf16, #tpu.memory_space<vmem>>, vector<1024x128xbf16>
    %cst = arith.constant dense<0.000000e+00> : vector<8x128xf32>
    %4 = tpu.matmul %2, %3, %cst {dimension_numbers = #tpu.dot_dimension_numbers<[1], [0], [0], [1], [0, 0, 1, 1], [], []>} : vector<8x1024xbf16>, vector<1024x128xbf16>, vector<8x128xf32> -> vector<8x128xf32>
    %5 = vector.extract_strided_slice %0 {offsets = [0, 0], sizes = [1, 128], strides = [1, 1]} : vector<12x128xf32> to vector<1x128xf32>
    %6 = vector.broadcast %5 : vector<1x128xf32> to vector<8x128xf32>
    %7 = arith.addf %4, %6 : vector<8x128xf32>
    %8 = vector.extract_strided_slice %0 {offsets = [1, 0], sizes = [1, 128], strides = [1, 1]} : vector<12x128xf32> to vector<1x128xf32>
    %9 = vector.extract_strided_slice %0 {offsets = [2, 0], sizes = [1, 128], strides = [1, 1]} : vector<12x128xf32> to vector<1x128xf32>
    %10 = vector.extract_strided_slice %0 {offsets = [3, 0], sizes = [1, 128], strides = [1, 1]} : vector<12x128xf32> to vector<1x128xf32>
    %11 = vector.extract_strided_slice %0 {offsets = [4, 0], sizes = [1, 128], strides = [1, 1]} : vector<12x128xf32> to vector<1x128xf32>
    %12 = vector.broadcast %10 : vector<1x128xf32> to vector<8x128xf32>
    %13 = arith.subf %7, %12 : vector<8x128xf32>
    %cst_5 = arith.constant 9.99999974E-6 : f32
    %14 = vector.broadcast %cst_5 : f32 to vector<1x128xf32>
    %15 = arith.addf %11, %14 : vector<1x128xf32>
    %16 = math.rsqrt %15 : vector<1x128xf32>
    %17 = vector.broadcast %16 : vector<1x128xf32> to vector<8x128xf32>
    %18 = arith.mulf %13, %17 : vector<8x128xf32>
    %19 = vector.broadcast %8 : vector<1x128xf32> to vector<8x128xf32>
    %20 = arith.mulf %18, %19 : vector<8x128xf32>
    %21 = vector.broadcast %9 : vector<1x128xf32> to vector<8x128xf32>
    %22 = arith.addf %20, %21 : vector<8x128xf32>
    %cst_6 = arith.constant 0.000000e+00 : f32
    %23 = vector.broadcast %cst_6 : f32 to vector<8x128xf32>
    %24 = arith.cmpf ogt, %22, %23 : vector<8x128xf32>
    %cst_7 = arith.constant 1.000000e-01 : f32
    %25 = vector.broadcast %cst_7 : f32 to vector<8x128xf32>
    %26 = arith.mulf %25, %22 : vector<8x128xf32>
    %27 = arith.select %24, %22, %26 : vector<8x128xi1>, vector<8x128xf32>
    %28 = arith.truncf %27 : vector<8x128xf32> to vector<8x128xbf16>
    %c0_8 = arith.constant 0 : index
    %c0_9 = arith.constant 0 : index
    %29 = vector.load %arg4[%c0_8, %c0_9] : memref<128x128xbf16, #tpu.memory_space<vmem>>, vector<128x128xbf16>
    %cst_10 = arith.constant dense<0.000000e+00> : vector<8x128xf32>
    %30 = tpu.matmul %28, %29, %cst_10 {dimension_numbers = #tpu.dot_dimension_numbers<[1], [0], [0], [1], [0, 0, 1, 1], [], []>} : vector<8x128xbf16>, vector<128x128xbf16>, vector<8x128xf32> -> vector<8x128xf32>
    %31 = vector.extract_strided_slice %0 {offsets = [5, 0], sizes = [1, 128], strides = [1, 1]} : vector<12x128xf32> to vector<1x128xf32>
    %32 = vector.broadcast %31 : vector<1x128xf32> to vector<8x128xf32>
    %33 = arith.addf %30, %32 : vector<8x128xf32>
    %cst_11 = arith.constant dense<0.000000e+00> : vector<8xf32>
    %34 = vector.multi_reduction <add>, %33, %cst_11 [1] : vector<8x128xf32> to vector<8xf32>
    %35 = vector.shape_cast %34 : vector<8xf32> to vector<8x1xf32>
    %36 = arith.mulf %33, %33 : vector<8x128xf32>
    %cst_12 = arith.constant dense<0.000000e+00> : vector<8xf32>
    %37 = vector.multi_reduction <add>, %36, %cst_12 [1] : vector<8x128xf32> to vector<8xf32>
    %38 = vector.shape_cast %37 : vector<8xf32> to vector<8x1xf32>
    %cst_13 = arith.constant 1.562500e-02 : f32
    %39 = vector.broadcast %cst_13 : f32 to vector<8x1xf32>
    %40 = arith.mulf %35, %39 : vector<8x1xf32>
    %cst_14 = arith.constant 1.562500e-02 : f32
    %41 = vector.broadcast %cst_14 : f32 to vector<8x1xf32>
    %42 = arith.mulf %38, %41 : vector<8x1xf32>
    %43 = arith.mulf %40, %40 : vector<8x1xf32>
    %44 = arith.subf %42, %43 : vector<8x1xf32>
    %cst_15 = arith.constant 0.000000e+00 : f32
    %45 = vector.broadcast %cst_15 : f32 to vector<8x1xf32>
    %46 = arith.maximumf %44, %45 : vector<8x1xf32>
    %47 = vector.broadcast %40 : vector<8x1xf32> to vector<8x128xf32>
    %48 = arith.subf %33, %47 : vector<8x128xf32>
    %cst_16 = arith.constant 9.99999974E-6 : f32
    %49 = vector.broadcast %cst_16 : f32 to vector<8x1xf32>
    %50 = arith.addf %46, %49 : vector<8x1xf32>
    %51 = math.rsqrt %50 : vector<8x1xf32>
    %52 = vector.broadcast %51 : vector<8x1xf32> to vector<8x128xf32>
    %53 = arith.mulf %48, %52 : vector<8x128xf32>
    %54 = vector.extract_strided_slice %0 {offsets = [6, 0], sizes = [1, 128], strides = [1, 1]} : vector<12x128xf32> to vector<1x128xf32>
    %55 = vector.broadcast %54 : vector<1x128xf32> to vector<8x128xf32>
    %56 = arith.mulf %53, %55 : vector<8x128xf32>
    %57 = vector.extract_strided_slice %0 {offsets = [7, 0], sizes = [1, 128], strides = [1, 1]} : vector<12x128xf32> to vector<1x128xf32>
    %58 = vector.broadcast %57 : vector<1x128xf32> to vector<8x128xf32>
    %59 = arith.addf %56, %58 : vector<8x128xf32>
    %cst_17 = arith.constant 0.000000e+00 : f32
    %60 = vector.broadcast %cst_17 : f32 to vector<8x128xf32>
    %61 = arith.maximumf %59, %60 : vector<8x128xf32>
    %62 = arith.truncf %61 : vector<8x128xf32> to vector<8x128xbf16>
    %c0_18 = arith.constant 0 : index
    %c0_19 = arith.constant 0 : index
    %63 = vector.load %arg5[%c0_18, %c0_19] : memref<128x128xbf16, #tpu.memory_space<vmem>>, vector<128x128xbf16>
    %cst_20 = arith.constant dense<0.000000e+00> : vector<8x128xf32>
    %64 = tpu.matmul %62, %63, %cst_20 {dimension_numbers = #tpu.dot_dimension_numbers<[1], [0], [0], [1], [0, 0, 1, 1], [], []>} : vector<8x128xbf16>, vector<128x128xbf16>, vector<8x128xf32> -> vector<8x128xf32>
    %65 = vector.extract_strided_slice %0 {offsets = [8, 0], sizes = [1, 128], strides = [1, 1]} : vector<12x128xf32> to vector<1x128xf32>
    %66 = vector.broadcast %65 : vector<1x128xf32> to vector<8x128xf32>
    %67 = arith.addf %64, %66 : vector<8x128xf32>
    %cst_21 = arith.constant dense<0.000000e+00> : vector<8xf32>
    %68 = vector.multi_reduction <add>, %67, %cst_21 [1] : vector<8x128xf32> to vector<8xf32>
    %69 = vector.shape_cast %68 : vector<8xf32> to vector<8x1xf32>
    %70 = arith.mulf %67, %67 : vector<8x128xf32>
    %cst_22 = arith.constant dense<0.000000e+00> : vector<8xf32>
    %71 = vector.multi_reduction <add>, %70, %cst_22 [1] : vector<8x128xf32> to vector<8xf32>
    %72 = vector.shape_cast %71 : vector<8xf32> to vector<8x1xf32>
    %cst_23 = arith.constant 3.125000e-02 : f32
    %73 = vector.broadcast %cst_23 : f32 to vector<8x1xf32>
    %74 = arith.mulf %69, %73 : vector<8x1xf32>
    %cst_24 = arith.constant 3.125000e-02 : f32
    %75 = vector.broadcast %cst_24 : f32 to vector<8x1xf32>
    %76 = arith.mulf %72, %75 : vector<8x1xf32>
    %77 = arith.mulf %74, %74 : vector<8x1xf32>
    %78 = arith.subf %76, %77 : vector<8x1xf32>
    %cst_25 = arith.constant 0.000000e+00 : f32
    %79 = vector.broadcast %cst_25 : f32 to vector<8x1xf32>
    %80 = arith.maximumf %78, %79 : vector<8x1xf32>
    %81 = vector.broadcast %74 : vector<8x1xf32> to vector<8x128xf32>
    %82 = arith.subf %67, %81 : vector<8x128xf32>
    %cst_26 = arith.constant 9.99999974E-6 : f32
    %83 = vector.broadcast %cst_26 : f32 to vector<8x1xf32>
    %84 = arith.addf %80, %83 : vector<8x1xf32>
    %85 = math.rsqrt %84 : vector<8x1xf32>
    %86 = vector.broadcast %85 : vector<8x1xf32> to vector<8x128xf32>
    %87 = arith.mulf %82, %86 : vector<8x128xf32>
    %88 = vector.extract_strided_slice %0 {offsets = [9, 0], sizes = [1, 128], strides = [1, 1]} : vector<12x128xf32> to vector<1x128xf32>
    %89 = vector.broadcast %88 : vector<1x128xf32> to vector<8x128xf32>
    %90 = arith.mulf %87, %89 : vector<8x128xf32>
    %91 = vector.extract_strided_slice %0 {offsets = [10, 0], sizes = [1, 128], strides = [1, 1]} : vector<12x128xf32> to vector<1x128xf32>
    %92 = vector.broadcast %91 : vector<1x128xf32> to vector<8x128xf32>
    %93 = arith.addf %90, %92 : vector<8x128xf32>
    %cst_27 = arith.constant 0.000000e+00 : f32
    %94 = vector.broadcast %cst_27 : f32 to vector<8x128xf32>
    %95 = arith.maximumf %93, %94 : vector<8x128xf32>
    %96 = arith.truncf %95 : vector<8x128xf32> to vector<8x128xbf16>
    %c0_28 = arith.constant 0 : index
    %c0_29 = arith.constant 0 : index
    %97 = vector.load %arg6[%c0_28, %c0_29] : memref<128x128xbf16, #tpu.memory_space<vmem>>, vector<128x128xbf16>
    %cst_30 = arith.constant dense<0.000000e+00> : vector<8x128xf32>
    %98 = tpu.matmul %96, %97, %cst_30 {dimension_numbers = #tpu.dot_dimension_numbers<[1], [0], [0], [1], [0, 0, 1, 1], [], []>} : vector<8x128xbf16>, vector<128x128xbf16>, vector<8x128xf32> -> vector<8x128xf32>
    %99 = vector.extract_strided_slice %0 {offsets = [11, 0], sizes = [1, 128], strides = [1, 1]} : vector<12x128xf32> to vector<1x128xf32>
    %100 = vector.broadcast %99 : vector<1x128xf32> to vector<8x128xf32>
    %101 = arith.addf %98, %100 : vector<8x128xf32>
    %c0_31 = arith.constant 0 : index
    %c0_32 = arith.constant 0 : index
    %102 = vector.load %arg7[%c0_31, %c0_32] : memref<8x128xf32, #tpu.memory_space<vmem>>, vector<8x128xf32>
    tpu.vector_store %arg7[%c0_31, %c0_32], %101 {strides = array<i32>} : memref<8x128xf32, #tpu.memory_space<vmem>>, vector<8x128xf32>,
    return
  }
  func.func @transform_0(%arg0: i32) -> (i32, i32) {
    %c0_i32 = arith.constant 0 : i32
    %c0_i32_0 = arith.constant 0 : i32
    return %arg0, %c0_i32 : i32, i32
  }
  func.func @transform_1(%arg0: i32) -> (i32, i32) {
    %c0_i32 = arith.constant 0 : i32
    %c0_i32_0 = arith.constant 0 : i32
    %c0_i32_1 = arith.constant 0 : i32
    return %c0_i32, %c0_i32_0 : i32, i32
  }
  func.func @transform_2(%arg0: i32) -> (i32, i32) {
    %c0_i32 = arith.constant 0 : i32
    %c0_i32_0 = arith.constant 0 : i32
    %c0_i32_1 = arith.constant 0 : i32
    return %c0_i32, %c0_i32_0 : i32, i32
  }
  func.func @transform_3(%arg0: i32) -> (i32, i32) {
    %c0_i32 = arith.constant 0 : i32
    %c0_i32_0 = arith.constant 0 : i32
    %c0_i32_1 = arith.constant 0 : i32
    return %c0_i32, %c0_i32_0 : i32, i32
  }
  func.func @transform_4(%arg0: i32) -> (i32, i32) {
    %c0_i32 = arith.constant 0 : i32
    %c0_i32_0 = arith.constant 0 : i32
    %c0_i32_1 = arith.constant 0 : i32
    return %c0_i32, %c0_i32_0 : i32, i32
  }
  func.func @transform_5(%arg0: i32) -> (i32, i32) {
    %c0_i32 = arith.constant 0 : i32
    %c0_i32_0 = arith.constant 0 : i32
    %c0_i32_1 = arith.constant 0 : i32
    return %c0_i32, %c0_i32_0 : i32, i32
  }
  func.func @transform_6(%arg0: i32) -> (i32, i32) {
    %c0_i32 = arith.constant 0 : i32
    %c0_i32_0 = arith.constant 0 : i32
    return %arg0, %c0_i32 : i32, i32
  }
}

</mosaic_0001>

<llo_original>
// kernel: tpu_custom_call.1
$region0: #{tpu_custom_call.1}
  #allocation0 [shape = 'u32[]', space=smem, size = 0x4, offset = 0x4, fixed_abs, tag = 'smem constant byte address 0x4 - core index']
  #allocation1 [shape = 'u32[144,128]{1,0:T(1,128)}', space=vmem, size = 0x12000, scoped, tag = 'internal scratch']
  %s0 = inlined_call_operand.hbm [shape: f32[8,1024], index: 0, kind: input, shape index: {}]
  %s1 = inlined_call_operand.hbm [shape: f32[12,128], index: 1, kind: input, shape index: {}]
  %s2 = inlined_call_operand.hbm [shape: bf16[1024,128], index: 2, kind: input, shape index: {}]
  %s3 = inlined_call_operand.hbm [shape: bf16[128,128], index: 3, kind: input, shape index: {}]
  %s4 = inlined_call_operand.hbm [shape: bf16[128,128], index: 4, kind: input, shape index: {}]
  %s5 = inlined_call_operand.hbm [shape: bf16[128,128], index: 5, kind: input, shape index: {}]
  %s6 = inlined_call_operand.hbm [shape: f32[8,128], index: 6, kind: output, shape index: {}]
  %s7 = sld [smem:[#allocation0]]
  $region58: #{tpu_custom_call.1} parent=0
    _
  %s9 = ssub.s32 1, %s7
  %s10 = scalar_select 0, %s9, %s7
  $region1: #{tpu_custom_call.1} parent=0
    #allocation2 [shape = 'u8[32768]{0}', space=vmem, size = 0x8000, scoped, tag = 'input window, operand 0, single buffered']
    #allocation3 [shape = 's32[1]{0}', space=sflag, size = 0x4, scoped, tag = 'scoped memory for tpu_custom_call.1']
    #allocation4 [shape = 's32[1]{0}', space=sflag, size = 0x4, scoped, tag = 'scoped memory for tpu_custom_call.1']
    #allocation5 [shape = 'u8[8192]{0}', space=vmem, size = 0x2000, scoped, tag = 'input window, operand 1, single buffered']
    #allocation6 [shape = 's32[1]{0}', space=sflag, size = 0x4, scoped, tag = 'scoped memory for tpu_custom_call.1']
    #allocation7 [shape = 'u8[262144]{0}', space=vmem, size = 0x40000, scoped, tag = 'input window, operand 2, single buffered']
    #allocation8 [shape = 'u8[32768]{0}', space=vmem, size = 0x8000, scoped, tag = 'input window, operand 3, single buffered']
    #allocation9 [shape = 's32[1]{0}', space=sflag, size = 0x4, scoped, tag = 'scoped memory for tpu_custom_call.1']
    #allocation10 [shape = 'u8[32768]{0}', space=vmem, size = 0x8000, scoped, tag = 'input window, operand 4, single buffered']
    #allocation11 [shape = 'u8[32768]{0}', space=vmem, size = 0x8000, scoped, tag = 'input window, operand 5, single buffered']
    #allocation12 [shape = 's32[1]{0}', space=sflag, size = 0x4, scoped, tag = 'scoped memory for tpu_custom_call.1']
    #allocation13 [shape = 'u8[4096]{0}', space=vmem, size = 0x1000, scoped, tag = 'output window, operand 0, single buffered']
    %11 = vsyncpa [#allocation3], 0
    %12 = vsyncpa [#allocation6], 0
    %13 = vsyncpa [#allocation9], 0
    %14 = vsyncpa [#allocation12], 0
    %15 = vsyncpa [#allocation4], 0
    // Predicated region
    $region2: #{tpu_custom_call.1} parent=1 // pred_check
      _
    $region3: #{tpu_custom_call.1} parent=1 // pred_check_branch
      %17 = sbr.rel (0) target = $region5
    $region4: #{tpu_custom_call.1} parent=1 // pred_region
      %s19 = ssub.s32 1024, 1024
      %20 = vsyncadd [#allocation3], %s19
      %s22 = sshll.u32 [#allocation2], 4
      %s23 = int_to_ptr.vmem [resolvable:$true] %s22
      %25 = dma.hbm_to_vmem [thread:$0]  %s0, 1024, %s23, [#allocation3]
    $region5: #{tpu_custom_call.1} parent=1 // pred_fallthru
      _
    // Predicated region
    $region6: #{tpu_custom_call.1} parent=1 // pred_check
      _
    $region7: #{tpu_custom_call.1} parent=1 // pred_check_branch
      %27 = sbr.rel (0) target = $region9
    $region8: #{tpu_custom_call.1} parent=1 // pred_region
      %s29 = ssub.s32 256, 256
      %30 = vsyncadd [#allocation6], %s29
      %s31 = sshll.u32 [#allocation5], 4
      %s32 = int_to_ptr.vmem [resolvable:$true] %s31
      %37 = dma.hbm_to_vmem [thread:$0]  %s1, 256, %s32, [#allocation6], 128, 128, 8
    $region9: #{tpu_custom_call.1} parent=1 // pred_fallthru
      _
    // Predicated region
    $region10: #{tpu_custom_call.1} parent=1 // pred_check
      _
    $region11: #{tpu_custom_call.1} parent=1 // pred_check_branch
      %39 = sbr.rel (0) target = $region13
    $region12: #{tpu_custom_call.1} parent=1 // pred_region
      %s41 = ssub.s32 8192, 8192
      %42 = vsyncadd [#allocation6], %s41
      %s43 = sshll.u32 [#allocation7], 4
      %s44 = int_to_ptr.vmem [resolvable:$true] %s43
      %49 = dma.hbm_to_vmem [thread:$0]  %s2, 8192, %s44, [#allocation6], 64, 64, 4
    $region13: #{tpu_custom_call.1} parent=1 // pred_fallthru
      _
    // Predicated region
    $region14: #{tpu_custom_call.1} parent=1 // pred_check
      _
    $region15: #{tpu_custom_call.1} parent=1 // pred_check_branch
      %51 = sbr.rel (0) target = $region17
    $region16: #{tpu_custom_call.1} parent=1 // pred_region
      %s53 = ssub.s32 1024, 1024
      %54 = vsyncadd [#allocation9], %s53
      %s55 = sshll.u32 [#allocation8], 4
      %s56 = int_to_ptr.vmem [resolvable:$true] %s55
      %61 = dma.hbm_to_vmem [thread:$0]  %s3, 1024, %s56, [#allocation9], 64, 64, 4
    $region17: #{tpu_custom_call.1} parent=1 // pred_fallthru
      _
    // Predicated region
    $region18: #{tpu_custom_call.1} parent=1 // pred_check
      _
    $region19: #{tpu_custom_call.1} parent=1 // pred_check_branch
      %63 = sbr.rel (0) target = $region21
    $region20: #{tpu_custom_call.1} parent=1 // pred_region
      %s65 = ssub.s32 1024, 1024
      %66 = vsyncadd [#allocation9], %s65
      %s67 = sshll.u32 [#allocation10], 4
      %s68 = int_to_ptr.vmem [resolvable:$true] %s67
      %73 = dma.hbm_to_vmem [thread:$0]  %s4, 1024, %s68, [#allocation9], 64, 64, 4
    $region21: #{tpu_custom_call.1} parent=1 // pred_fallthru
      _
    // Predicated region
    $region22: #{tpu_custom_call.1} parent=1 // pred_check
      _
    $region23: #{tpu_custom_call.1} parent=1 // pred_check_branch
      %75 = sbr.rel (0) target = $region25
    $region24: #{tpu_custom_call.1} parent=1 // pred_region
      %s77 = ssub.s32 1024, 1024
      %78 = vsyncadd [#allocation12], %s77
      %s79 = sshll.u32 [#allocation11], 4
      %s80 = int_to_ptr.vmem [resolvable:$true] %s79
      %85 = dma.hbm_to_vmem [thread:$0]  %s5, 1024, %s80, [#allocation12], 64, 64, 4
    $region25: #{tpu_custom_call.1} parent=1 // pred_fallthru
      _
    // Predicated region
    $region26: #{tpu_custom_call.1} parent=1 // pred_check
      _
    $region27: #{tpu_custom_call.1} parent=1 // pred_check_branch
      %87 = sbr.rel (0) target = $region29
    $region28: #{tpu_custom_call.1} parent=1 // pred_region
      %88 = dma.done [#allocation3], 1024
    $region29: #{tpu_custom_call.1} parent=1 // pred_fallthru
      _
    // Predicated region
    $region30: #{tpu_custom_call.1} parent=1 // pred_check
      _
    $region31: #{tpu_custom_call.1} parent=1 // pred_check_branch
      %90 = sbr.rel (0) target = $region33
    $region32: #{tpu_custom_call.1} parent=1 // pred_region
      %91 = dma.done [#allocation6], 256
    $region33: #{tpu_custom_call.1} parent=1 // pred_fallthru
      _
    // Predicated region
    $region34: #{tpu_custom_call.1} parent=1 // pred_check
      _
    $region35: #{tpu_custom_call.1} parent=1 // pred_check_branch
      %93 = sbr.rel (0) target = $region37
    $region36: #{tpu_custom_call.1} parent=1 // pred_region
      %94 = dma.done [#allocation6], 8192
    $region37: #{tpu_custom_call.1} parent=1 // pred_fallthru
      _
    // Predicated region
    $region38: #{tpu_custom_call.1} parent=1 // pred_check
      _
    $region39: #{tpu_custom_call.1} parent=1 // pred_check_branch
      %96 = sbr.rel (0) target = $region41
    $region40: #{tpu_custom_call.1} parent=1 // pred_region
      %97 = dma.done [#allocation9], 1024
    $region41: #{tpu_custom_call.1} parent=1 // pred_fallthru
      _
    // Predicated region
    $region42: #{tpu_custom_call.1} parent=1 // pred_check
      _
    $region43: #{tpu_custom_call.1} parent=1 // pred_check_branch
      %99 = sbr.rel (0) target = $region45
    $region44: #{tpu_custom_call.1} parent=1 // pred_region
      %100 = dma.done [#allocation9], 1024
    $region45: #{tpu_custom_call.1} parent=1 // pred_fallthru
      _
    // Predicated region
    $region46: #{tpu_custom_call.1} parent=1 // pred_check
      _
    $region47: #{tpu_custom_call.1} parent=1 // pred_check_branch
      %102 = sbr.rel (0) target = $region49
    $region48: #{tpu_custom_call.1} parent=1 // pred_region
      %103 = dma.done [#allocation12], 1024
    $region49: #{tpu_custom_call.1} parent=1 // pred_fallthru
      _
    %v105 = vld [vmem:[#allocation5] sm:$0xff]
    %v106 = vld [vmem:[#allocation5 + $0x8] sm:$0xf]
    %v107 = vld [vmem:[#allocation2] sm:$0xff]
    %v108 = vld [vmem:[#allocation2 + $0x8] sm:$0xff]
    %v109 = vld [vmem:[#allocation2 + $0x10] sm:$0xff]
    %v110 = vld [vmem:[#allocation2 + $0x18] sm:$0xff]
    %v111 = vld [vmem:[#allocation2 + $0x20] sm:$0xff]
    %v112 = vld [vmem:[#allocation2 + $0x28] sm:$0xff]
    %v113 = vld [vmem:[#allocation2 + $0x30] sm:$0xff]
    %v114 = vld [vmem:[#allocation2 + $0x38] sm:$0xff]
    %v115 = vpack.c.bf16 %v107, %v107
    %v116 = vpack.c.bf16 %v108, %v108
    %v117 = vpack.c.bf16 %v109, %v109
    %v118 = vpack.c.bf16 %v110, %v110
    %v119 = vpack.c.bf16 %v111, %v111
    %v120 = vpack.c.bf16 %v112, %v112
    %v121 = vpack.c.bf16 %v113, %v113
    %v122 = vpack.c.bf16 %v114, %v114
    %v123 = vld [vmem:[#allocation7] sm:$0xf]
    %v124 = vld [vmem:[#allocation7 + $0x4] sm:$0xf]
    %v125 = vld [vmem:[#allocation7 + $0x8] sm:$0xf]
    %v126 = vld [vmem:[#allocation7 + $0xc] sm:$0xf]
    %v127 = vld [vmem:[#allocation7 + $0x10] sm:$0xf]
    %v128 = vld [vmem:[#allocation7 + $0x14] sm:$0xf]
    %v129 = vld [vmem:[#allocation7 + $0x18] sm:$0xf]
    %v130 = vld [vmem:[#allocation7 + $0x1c] sm:$0xf]
    %v131 = vld [vmem:[#allocation7 + $0x20] sm:$0xf]
    %v132 = vld [vmem:[#allocation7 + $0x24] sm:$0xf]
    %v133 = vld [vmem:[#allocation7 + $0x28] sm:$0xf]
    %v134 = vld [vmem:[#allocation7 + $0x2c] sm:$0xf]
    %v135 = vld [vmem:[#allocation7 + $0x30] sm:$0xf]
    %v136 = vld [vmem:[#allocation7 + $0x34] sm:$0xf]
    %v137 = vld [vmem:[#allocation7 + $0x38] sm:$0xf]
    %v138 = vld [vmem:[#allocation7 + $0x3c] sm:$0xf]
    %v139 = vld [vmem:[#allocation7 + $0x40] sm:$0xf]
    %v140 = vld [vmem:[#allocation7 + $0x44] sm:$0xf]
    %v141 = vld [vmem:[#allocation7 + $0x48] sm:$0xf]
    %v142 = vld [vmem:[#allocation7 + $0x4c] sm:$0xf]
    %v143 = vld [vmem:[#allocation7 + $0x50] sm:$0xf]
    %v144 = vld [vmem:[#allocation7 + $0x54] sm:$0xf]
    %v145 = vld [vmem:[#allocation7 + $0x58] sm:$0xf]
    %v146 = vld [vmem:[#allocation7 + $0x5c] sm:$0xf]
    %v147 = vld [vmem:[#allocation7 + $0x60] sm:$0xf]
    %v148 = vld [vmem:[#allocation7 + $0x64] sm:$0xf]
    %v149 = vld [vmem:[#allocation7 + $0x68] sm:$0xf]
    %v150 = vld [vmem:[#allocation7 + $0x6c] sm:$0xf]
    %v151 = vld [vmem:[#allocation7 + $0x70] sm:$0xf]
    %v152 = vld [vmem:[#allocation7 + $0x74] sm:$0xf]
    %v153 = vld [vmem:[#allocation7 + $0x78] sm:$0xf]
    %v154 = vld [vmem:[#allocation7 + $0x7c] sm:$0xf]
    %v155 = vld [vmem:[#allocation7 + $0x80] sm:$0xf]
    %v156 = vld [vmem:[#allocation7 + $0x84] sm:$0xf]
    %v157 = vld [vmem:[#allocation7 + $0x88] sm:$0xf]
    %v158 = vld [vmem:[#allocation7 + $0x8c] sm:$0xf]
    %v159 = vld [vmem:[#allocation7 + $0x90] sm:$0xf]
    %v160 = vld [vmem:[#allocation7 + $0x94] sm:$0xf]
    %v161 = vld [vmem:[#allocation7 + $0x98] sm:$0xf]
    %v162 = vld [vmem:[#allocation7 + $0x9c] sm:$0xf]
    %v163 = vld [vmem:[#allocation7 + $0xa0] sm:$0xf]
    %v164 = vld [vmem:[#allocation7 + $0xa4] sm:$0xf]
    %v165 = vld [vmem:[#allocation7 + $0xa8] sm:$0xf]
    %v166 = vld [vmem:[#allocation7 + $0xac] sm:$0xf]
    %v167 = vld [vmem:[#allocation7 + $0xb0] sm:$0xf]
    %v168 = vld [vmem:[#allocation7 + $0xb4] sm:$0xf]
    %v169 = vld [vmem:[#allocation7 + $0xb8] sm:$0xf]
    %v170 = vld [vmem:[#allocation7 + $0xbc] sm:$0xf]
    %v171 = vld [vmem:[#allocation7 + $0xc0] sm:$0xf]
    %v172 = vld [vmem:[#allocation7 + $0xc4] sm:$0xf]
    %v173 = vld [vmem:[#allocation7 + $0xc8] sm:$0xf]
    %v174 = vld [vmem:[#allocation7 + $0xcc] sm:$0xf]
    %v175 = vld [vmem:[#allocation7 + $0xd0] sm:$0xf]
    %v176 = vld [vmem:[#allocation7 + $0xd4] sm:$0xf]
    %v177 = vld [vmem:[#allocation7 + $0xd8] sm:$0xf]
    %v178 = vld [vmem:[#allocation7 + $0xdc] sm:$0xf]
    %v179 = vld [vmem:[#allocation7 + $0xe0] sm:$0xf]
    %v180 = vld [vmem:[#allocation7 + $0xe4] sm:$0xf]
    %v181 = vld [vmem:[#allocation7 + $0xe8] sm:$0xf]
    %v182 = vld [vmem:[#allocation7 + $0xec] sm:$0xf]
    %v183 = vld [vmem:[#allocation7 + $0xf0] sm:$0xf]
    %v184 = vld [vmem:[#allocation7 + $0xf4] sm:$0xf]
    %v185 = vld [vmem:[#allocation7 + $0xf8] sm:$0xf]
    %v186 = vld [vmem:[#allocation7 + $0xfc] sm:$0xf]
    %v187 = vld [vmem:[#allocation7 + $0x100] sm:$0xf]
    %v188 = vld [vmem:[#allocation7 + $0x104] sm:$0xf]
    %v189 = vld [vmem:[#allocation7 + $0x108] sm:$0xf]
    %v190 = vld [vmem:[#allocation7 + $0x10c] sm:$0xf]
    %v191 = vld [vmem:[#allocation7 + $0x110] sm:$0xf]
    %v192 = vld [vmem:[#allocation7 + $0x114] sm:$0xf]
    %v193 = vld [vmem:[#allocation7 + $0x118] sm:$0xf]
    %v194 = vld [vmem:[#allocation7 + $0x11c] sm:$0xf]
    %v195 = vld [vmem:[#allocation7 + $0x120] sm:$0xf]
    %v196 = vld [vmem:[#allocation7 + $0x124] sm:$0xf]
    %v197 = vld [vmem:[#allocation7 + $0x128] sm:$0xf]
    %v198 = vld [vmem:[#allocation7 + $0x12c] sm:$0xf]
    %v199 = vld [vmem:[#allocation7 + $0x130] sm:$0xf]
    %v200 = vld [vmem:[#allocation7 + $0x134] sm:$0xf]
    %v201 = vld [vmem:[#allocation7 + $0x138] sm:$0xf]
    %v202 = vld [vmem:[#allocation7 + $0x13c] sm:$0xf]
    %v203 = vld [vmem:[#allocation7 + $0x140] sm:$0xf]
    %v204 = vld [vmem:[#allocation7 + $0x144] sm:$0xf]
    %v205 = vld [vmem:[#allocation7 + $0x148] sm:$0xf]
    %v206 = vld [vmem:[#allocation7 + $0x14c] sm:$0xf]
    %v207 = vld [vmem:[#allocation7 + $0x150] sm:$0xf]
    %v208 = vld [vmem:[#allocation7 + $0x154] sm:$0xf]
    %v209 = vld [vmem:[#allocation7 + $0x158] sm:$0xf]
    %v210 = vld [vmem:[#allocation7 + $0x15c] sm:$0xf]
    %v211 = vld [vmem:[#allocation7 + $0x160] sm:$0xf]
    %v212 = vld [vmem:[#allocation7 + $0x164] sm:$0xf]
    %v213 = vld [vmem:[#allocation7 + $0x168] sm:$0xf]
    %v214 = vld [vmem:[#allocation7 + $0x16c] sm:$0xf]
    %v215 = vld [vmem:[#allocation7 + $0x170] sm:$0xf]
    %v216 = vld [vmem:[#allocation7 + $0x174] sm:$0xf]
    %v217 = vld [vmem:[#allocation7 + $0x178] sm:$0xf]
    %v218 = vld [vmem:[#allocation7 + $0x17c] sm:$0xf]
    %v219 = vld [vmem:[#allocation7 + $0x180] sm:$0xf]
    %v220 = vld [vmem:[#allocation7 + $0x184] sm:$0xf]
    %v221 = vld [vmem:[#allocation7 + $0x188] sm:$0xf]
    %v222 = vld [vmem:[#allocation7 + $0x18c] sm:$0xf]
    %v223 = vld [vmem:[#allocation7 + $0x190] sm:$0xf]
    %v224 = vld [vmem:[#allocation7 + $0x194] sm:$0xf]
    %v225 = vld [vmem:[#allocation7 + $0x198] sm:$0xf]
    %v226 = vld [vmem:[#allocation7 + $0x19c] sm:$0xf]
    %v227 = vld [vmem:[#allocation7 + $0x1a0] sm:$0xf]
    %v228 = vld [vmem:[#allocation7 + $0x1a4] sm:$0xf]
    %v229 = vld [vmem:[#allocation7 + $0x1a8] sm:$0xf]
    %v230 = vld [vmem:[#allocation7 + $0x1ac] sm:$0xf]
    %v231 = vld [vmem:[#allocation7 + $0x1b0] sm:$0xf]
    %v232 = vld [vmem:[#allocation7 + $0x1b4] sm:$0xf]
    %v233 = vld [vmem:[#allocation7 + $0x1b8] sm:$0xf]
    %v234 = vld [vmem:[#allocation7 + $0x1bc] sm:$0xf]
    %v235 = vld [vmem:[#allocation7 + $0x1c0] sm:$0xf]
    %v236 = vld [vmem:[#allocation7 + $0x1c4] sm:$0xf]
    %v237 = vld [vmem:[#allocation7 + $0x1c8] sm:$0xf]
    %v238 = vld [vmem:[#allocation7 + $0x1cc] sm:$0xf]
    %v239 = vld [vmem:[#allocation7 + $0x1d0] sm:$0xf]
    %v240 = vld [vmem:[#allocation7 + $0x1d4] sm:$0xf]
    %v241 = vld [vmem:[#allocation7 + $0x1d8] sm:$0xf]
    %v242 = vld [vmem:[#allocation7 + $0x1dc] sm:$0xf]
    %v243 = vld [vmem:[#allocation7 + $0x1e0] sm:$0xf]
    %v244 = vld [vmem:[#allocation7 + $0x1e4] sm:$0xf]
    %v245 = vld [vmem:[#allocation7 + $0x1e8] sm:$0xf]
    %v246 = vld [vmem:[#allocation7 + $0x1ec] sm:$0xf]
    %v247 = vld [vmem:[#allocation7 + $0x1f0] sm:$0xf]
    %v248 = vld [vmem:[#allocation7 + $0x1f4] sm:$0xf]
    %v249 = vld [vmem:[#allocation7 + $0x1f8] sm:$0xf]
    %v250 = vld [vmem:[#allocation7 + $0x1fc] sm:$0xf]
    %v251 = vlaneseq
    %v252 = vshrl.u32 %v251, 7
    %v253 = vsub.s32 0, %v252
    %v254 = vrot.slane %v105, %v253
    %v383 = vunpack.c.l.b16 %v123
    %v384 = vunpack.c.l.b16 %v124
    %v385 = vunpack.c.l.b16 %v125
    %v386 = vunpack.c.l.b16 %v126
    %v387 = vunpack.c.l.b16 %v127
    %v388 = vunpack.c.l.b16 %v128
    %v389 = vunpack.c.l.b16 %v129
    %v390 = vunpack.c.l.b16 %v130
    %v391 = vunpack.c.l.b16 %v131
    %v392 = vunpack.c.l.b16 %v132
    %v393 = vunpack.c.l.b16 %v133
    %v394 = vunpack.c.l.b16 %v134
    %v395 = vunpack.c.l.b16 %v135
    %v396 = vunpack.c.l.b16 %v136
    %v397 = vunpack.c.l.b16 %v137
    %v398 = vunpack.c.l.b16 %v138
    %v399 = vunpack.c.l.b16 %v139
    %v400 = vunpack.c.l.b16 %v140
    %v401 = vunpack.c.l.b16 %v141
    %v402 = vunpack.c.l.b16 %v142
    %v403 = vunpack.c.l.b16 %v143
    %v404 = vunpack.c.l.b16 %v144
    %v405 = vunpack.c.l.b16 %v145
    %v406 = vunpack.c.l.b16 %v146
    %v407 = vunpack.c.l.b16 %v147
    %v408 = vunpack.c.l.b16 %v148
    %v409 = vunpack.c.l.b16 %v149
    %v410 = vunpack.c.l.b16 %v150
    %v411 = vunpack.c.l.b16 %v151
    %v412 = vunpack.c.l.b16 %v152
    %v413 = vunpack.c.l.b16 %v153
    %v414 = vunpack.c.l.b16 %v154
    %v415 = vunpack.c.l.b16 %v155
    %v416 = vunpack.c.l.b16 %v156
    %v417 = vunpack.c.l.b16 %v157
    %v418 = vunpack.c.l.b16 %v158
    %v419 = vunpack.c.l.b16 %v159
    %v420 = vunpack.c.l.b16 %v160
    %v421 = vunpack.c.l.b16 %v161
    %v422 = vunpack.c.l.b16 %v162
    %v423 = vunpack.c.l.b16 %v163
    %v424 = vunpack.c.l.b16 %v164
    %v425 = vunpack.c.l.b16 %v165
    %v426 = vunpack.c.l.b16 %v166
    %v427 = vunpack.c.l.b16 %v167
    %v428 = vunpack.c.l.b16 %v168
    %v429 = vunpack.c.l.b16 %v169
    %v430 = vunpack.c.l.b16 %v170
    %v431 = vunpack.c.l.b16 %v171
    %v432 = vunpack.c.l.b16 %v172
    %v433 = vunpack.c.l.b16 %v173
    %v434 = vunpack.c.l.b16 %v174
    %v435 = vunpack.c.l.b16 %v175
    %v436 = vunpack.c.l.b16 %v176
    %v437 = vunpack.c.l.b16 %v177
    %v438 = vunpack.c.l.b16 %v178
    %v439 = vunpack.c.l.b16 %v179
    %v440 = vunpack.c.l.b16 %v180
    %v441 = vunpack.c.l.b16 %v181
    %v442 = vunpack.c.l.b16 %v182
    %v443 = vunpack.c.l.b16 %v183
    %v444 = vunpack.c.l.b16 %v184
    %v445 = vunpack.c.l.b16 %v185
    %v446 = vunpack.c.l.b16 %v186
    %v447 = vunpack.c.l.b16 %v187
    %v448 = vunpack.c.l.b16 %v188
    %v449 = vunpack.c.l.b16 %v189
    %v450 = vunpack.c.l.b16 %v190
    %v451 = vunpack.c.l.b16 %v191
    %v452 = vunpack.c.l.b16 %v192
    %v453 = vunpack.c.l.b16 %v193
    %v454 = vunpack.c.l.b16 %v194
    %v455 = vunpack.c.l.b16 %v195
    %v456 = vunpack.c.l.b16 %v196
    %v457 = vunpack.c.l.b16 %v197
    %v458 = vunpack.c.l.b16 %v198
    %v459 = vunpack.c.l.b16 %v199
    %v460 = vunpack.c.l.b16 %v200
    %v461 = vunpack.c.l.b16 %v201
    %v462 = vunpack.c.l.b16 %v202
    %v463 = vunpack.c.l.b16 %v203
    %v464 = vunpack.c.l.b16 %v204
    %v465 = vunpack.c.l.b16 %v205
    %v466 = vunpack.c.l.b16 %v206
    %v467 = vunpack.c.l.b16 %v207
    %v468 = vunpack.c.l.b16 %v208
    %v469 = vunpack.c.l.b16 %v209
    %v470 = vunpack.c.l.b16 %v210
    %v471 = vunpack.c.l.b16 %v211
    %v472 = vunpack.c.l.b16 %v212
    %v473 = vunpack.c.l.b16 %v213
    %v474 = vunpack.c.l.b16 %v214
    %v475 = vunpack.c.l.b16 %v215
    %v476 = vunpack.c.l.b16 %v216
    %v477 = vunpack.c.l.b16 %v217
    %v478 = vunpack.c.l.b16 %v218
    %v479 = vunpack.c.l.b16 %v219
    %v480 = vunpack.c.l.b16 %v220
    %v481 = vunpack.c.l.b16 %v221
    %v482 = vunpack.c.l.b16 %v222
    %v483 = vunpack.c.l.b16 %v223
    %v484 = vunpack.c.l.b16 %v224
    %v485 = vunpack.c.l.b16 %v225
    %v486 = vunpack.c.l.b16 %v226
    %v487 = vunpack.c.l.b16 %v227
    %v488 = vunpack.c.l.b16 %v228
    %v489 = vunpack.c.l.b16 %v229
    %v490 = vunpack.c.l.b16 %v230
    %v491 = vunpack.c.l.b16 %v231
    %v492 = vunpack.c.l.b16 %v232
    %v493 = vunpack.c.l.b16 %v233
    %v494 = vunpack.c.l.b16 %v234
    %v495 = vunpack.c.l.b16 %v235
    %v496 = vunpack.c.l.b16 %v236
    %v497 = vunpack.c.l.b16 %v237
    %v498 = vunpack.c.l.b16 %v238
    %v499 = vunpack.c.l.b16 %v239
    %v500 = vunpack.c.l.b16 %v240
    %v501 = vunpack.c.l.b16 %v241
    %v502 = vunpack.c.l.b16 %v242
    %v503 = vunpack.c.l.b16 %v243
    %v504 = vunpack.c.l.b16 %v244
    %v505 = vunpack.c.l.b16 %v245
    %v506 = vunpack.c.l.b16 %v246
    %v507 = vunpack.c.l.b16 %v247
    %v508 = vunpack.c.l.b16 %v248
    %v509 = vunpack.c.l.b16 %v249
    %v510 = vunpack.c.l.b16 %v250
    %v511 = vpack.c.b16 %v384, %v383
    %v512 = vpack.c.b16 %v386, %v385
    %v513 = vpack.c.b16 %v388, %v387
    %v514 = vpack.c.b16 %v390, %v389
    %v515 = vpack.c.b16 %v392, %v391
    %v516 = vpack.c.b16 %v394, %v393
    %v517 = vpack.c.b16 %v396, %v395
    %v518 = vpack.c.b16 %v398, %v397
    %v519 = vpack.c.b16 %v400, %v399
    %v520 = vpack.c.b16 %v402, %v401
    %v521 = vpack.c.b16 %v404, %v403
    %v522 = vpack.c.b16 %v406, %v405
    %v523 = vpack.c.b16 %v408, %v407
    %v524 = vpack.c.b16 %v410, %v409
    %v525 = vpack.c.b16 %v412, %v411
    %v526 = vpack.c.b16 %v414, %v413
    %v527 = vpack.c.b16 %v416, %v415
    %v528 = vpack.c.b16 %v418, %v417
    %v529 = vpack.c.b16 %v420, %v419
    %v530 = vpack.c.b16 %v422, %v421
    %v531 = vpack.c.b16 %v424, %v423
    %v532 = vpack.c.b16 %v426, %v425
    %v533 = vpack.c.b16 %v428, %v427
    %v534 = vpack.c.b16 %v430, %v429
    %v535 = vpack.c.b16 %v432, %v431
    %v536 = vpack.c.b16 %v434, %v433
    %v537 = vpack.c.b16 %v436, %v435
    %v538 = vpack.c.b16 %v438, %v437
    %v539 = vpack.c.b16 %v440, %v439
    %v540 = vpack.c.b16 %v442, %v441
    %v541 = vpack.c.b16 %v444, %v443
    %v542 = vpack.c.b16 %v446, %v445
    %v543 = vpack.c.b16 %v448, %v447
    %v544 = vpack.c.b16 %v450, %v449
    %v545 = vpack.c.b16 %v452, %v451
    %v546 = vpack.c.b16 %v454, %v453
    %v547 = vpack.c.b16 %v456, %v455
    %v548 = vpack.c.b16 %v458, %v457
    %v549 = vpack.c.b16 %v460, %v459
    %v550 = vpack.c.b16 %v462, %v461
    %v551 = vpack.c.b16 %v464, %v463
    %v552 = vpack.c.b16 %v466, %v465
    %v553 = vpack.c.b16 %v468, %v467
    %v554 = vpack.c.b16 %v470, %v469
    %v555 = vpack.c.b16 %v472, %v471
    %v556 = vpack.c.b16 %v474, %v473
    %v557 = vpack.c.b16 %v476, %v475
    %v558 = vpack.c.b16 %v478, %v477
    %v559 = vpack.c.b16 %v480, %v479
    %v560 = vpack.c.b16 %v482, %v481
    %v561 = vpack.c.b16 %v484, %v483
    %v562 = vpack.c.b16 %v486, %v485
    %v563 = vpack.c.b16 %v488, %v487
    %v564 = vpack.c.b16 %v490, %v489
    %v565 = vpack.c.b16 %v492, %v491
    %v566 = vpack.c.b16 %v494, %v493
    %v567 = vpack.c.b16 %v496, %v495
    %v568 = vpack.c.b16 %v498, %v497
    %v569 = vpack.c.b16 %v500, %v499
    %v570 = vpack.c.b16 %v502, %v501
    %v571 = vpack.c.b16 %v504, %v503
    %v572 = vpack.c.b16 %v506, %v505
    %v573 = vpack.c.b16 %v508, %v507
    %v574 = vpack.c.b16 %v510, %v509
    %639 = vmatprep.subr.bf16.mxu0 0
    %640 = vmatpush1.bf16.msra.mxu0 %v511
    %641 = vmatprep.subr.bf16.mxu0 0
    %642 = vmatpush1.bf16.msra.mxu0 %v512
    %643 = vmatprep.subr.bf16.mxu0 0
    %644 = vmatpush1.bf16.msra.mxu0 %v513
    %645 = vmatprep.subr.bf16.mxu0 0
    %646 = vmatpush1.bf16.msra.mxu0 %v514
    %647 = vmatprep.subr.bf16.mxu0 0
    %648 = vmatpush1.bf16.msra.mxu0 %v515
    %649 = vmatprep.subr.bf16.mxu0 0
    %650 = vmatpush1.bf16.msra.mxu0 %v516
    %651 = vmatprep.subr.bf16.mxu0 0
    %652 = vmatpush1.bf16.msra.mxu0 %v517
    %653 = vmatprep.subr.bf16.mxu0 0
    %654 = vmatpush1.bf16.msra.mxu0 %v518
    %655 = vmatprep.subr.bf16.mxu0 0
    %656 = vmatpush1.bf16.msra.mxu0 %v519
    %657 = vmatprep.subr.bf16.mxu0 0
    %658 = vmatpush1.bf16.msra.mxu0 %v520
    %659 = vmatprep.subr.bf16.mxu0 0
    %660 = vmatpush1.bf16.msra.mxu0 %v521
    %661 = vmatprep.subr.bf16.mxu0 0
    %662 = vmatpush1.bf16.msra.mxu0 %v522
    %663 = vmatprep.subr.bf16.mxu0 0
    %664 = vmatpush1.bf16.msra.mxu0 %v523
    %665 = vmatprep.subr.bf16.mxu0 0
    %666 = vmatpush1.bf16.msra.mxu0 %v524
    %667 = vmatprep.subr.bf16.mxu0 0
    %668 = vmatpush1.bf16.msra.mxu0 %v525
    %669 = vmatprep.subr.bf16.mxu0 0
    %670 = vmatpush1.bf16.msra.mxu0 %v526
    %671 = vmatprep.mubr.bf16.mxu0 %v116
    %672 = vmatmul.mubr.bf16.gmra.mrb[0].mxu0 %v115
    %v673 = vpop.f32.mrb[0].mxu0
    %v674 = vadd.f32 %v254, %v673
    %v675 = vpop.f32.mrb[0].mxu0
    %v676 = vpop.f32.mrb[0].mxu0
    %v677 = vpop.f32.mrb[0].mxu0
    %678 = vdwg.mxu0
    %679 = vmatprep.subr.bf16.mxu0 0
    %680 = vmatpush1.bf16.msra.mxu0 %v527
    %681 = vmatprep.subr.bf16.mxu0 0
    %682 = vmatpush1.bf16.msra.mxu0 %v528
    %683 = vmatprep.subr.bf16.mxu0 0
    %684 = vmatpush1.bf16.msra.mxu0 %v529
    %685 = vmatprep.subr.bf16.mxu0 0
    %686 = vmatpush1.bf16.msra.mxu0 %v530
    %687 = vmatprep.subr.bf16.mxu0 0
    %688 = vmatpush1.bf16.msra.mxu0 %v531
    %689 = vmatprep.subr.bf16.mxu0 0
    %690 = vmatpush1.bf16.msra.mxu0 %v532
    %691 = vmatprep.subr.bf16.mxu0 0
    %692 = vmatpush1.bf16.msra.mxu0 %v533
    %693 = vmatprep.subr.bf16.mxu0 0
    %694 = vmatpush1.bf16.msra.mxu0 %v534
    %695 = vmatprep.subr.bf16.mxu0 0
    %696 = vmatpush1.bf16.msra.mxu0 %v535
    %697 = vmatprep.subr.bf16.mxu0 0
    %698 = vmatpush1.bf16.msra.mxu0 %v536
    %699 = vmatprep.subr.bf16.mxu0 0
    %700 = vmatpush1.bf16.msra.mxu0 %v537
    %701 = vmatprep.subr.bf16.mxu0 0
    %702 = vmatpush1.bf16.msra.mxu0 %v538
    %703 = vmatprep.subr.bf16.mxu0 0
    %704 = vmatpush1.bf16.msra.mxu0 %v539
    %705 = vmatprep.subr.bf16.mxu0 0
    %706 = vmatpush1.bf16.msra.mxu0 %v540
    %707 = vmatprep.subr.bf16.mxu0 0
    %708 = vmatpush1.bf16.msra.mxu0 %v541
    %709 = vmatprep.subr.bf16.mxu0 0
    %710 = vmatpush1.bf16.msra.mxu0 %v542
    %711 = vmatprep.mubr.bf16.mxu0 %v118
    %712 = vmatmul.mubr.bf16.gmra.mrb[0].mxu0 %v117
    %v713 = vpop.f32.mrb[0].mxu0
    %v714 = vadd.f32 %v674, %v713
    %v715 = vpop.f32.mrb[0].mxu0
    %v716 = vpop.f32.mrb[0].mxu0
    %v717 = vpop.f32.mrb[0].mxu0
    %718 = vdwg.mxu0
    %719 = vmatprep.subr.bf16.mxu0 0
    %720 = vmatpush1.bf16.msra.mxu0 %v543
    %721 = vmatprep.subr.bf16.mxu0 0
    %722 = vmatpush1.bf16.msra.mxu0 %v544
    %723 = vmatprep.subr.bf16.mxu0 0
    %724 = vmatpush1.bf16.msra.mxu0 %v545
    %725 = vmatprep.subr.bf16.mxu0 0
    %726 = vmatpush1.bf16.msra.mxu0 %v546
    %727 = vmatprep.subr.bf16.mxu0 0
    %728 = vmatpush1.bf16.msra.mxu0 %v547
    %729 = vmatprep.subr.bf16.mxu0 0
    %730 = vmatpush1.bf16.msra.mxu0 %v548
    %731 = vmatprep.subr.bf16.mxu0 0
    %732 = vmatpush1.bf16.msra.mxu0 %v549
    %733 = vmatprep.subr.bf16.mxu0 0
    %734 = vmatpush1.bf16.msra.mxu0 %v550
    %735 = vmatprep.subr.bf16.mxu0 0
    %736 = vmatpush1.bf16.msra.mxu0 %v551
    %737 = vmatprep.subr.bf16.mxu0 0
    %738 = vmatpush1.bf16.msra.mxu0 %v552
    %739 = vmatprep.subr.bf16.mxu0 0
    %740 = vmatpush1.bf16.msra.mxu0 %v553
    %741 = vmatprep.subr.bf16.mxu0 0
    %742 = vmatpush1.bf16.msra.mxu0 %v554
    %743 = vmatprep.subr.bf16.mxu0 0
    %744 = vmatpush1.bf16.msra.mxu0 %v555
    %745 = vmatprep.subr.bf16.mxu0 0
    %746 = vmatpush1.bf16.msra.mxu0 %v556
    %747 = vmatprep.subr.bf16.mxu0 0
    %748 = vmatpush1.bf16.msra.mxu0 %v557
    %749 = vmatprep.subr.bf16.mxu0 0
    %750 = vmatpush1.bf16.msra.mxu0 %v558
    %751 = vmatprep.mubr.bf16.mxu0 %v120
    %752 = vmatmul.mubr.bf16.gmra.mrb[0].mxu0 %v119
    %v753 = vpop.f32.mrb[0].mxu0
    %v754 = vadd.f32 %v714, %v753
    %v755 = vpop.f32.mrb[0].mxu0
    %v756 = vpop.f32.mrb[0].mxu0
    %v757 = vpop.f32.mrb[0].mxu0
    %758 = vdwg.mxu0
    %759 = vmatprep.subr.bf16.mxu0 0
    %760 = vmatpush1.bf16.msra.mxu0 %v559
    %761 = vmatprep.subr.bf16.mxu0 0
    %762 = vmatpush1.bf16.msra.mxu0 %v560
    %763 = vmatprep.subr.bf16.mxu0 0
    %764 = vmatpush1.bf16.msra.mxu0 %v561
    %765 = vmatprep.subr.bf16.mxu0 0
    %766 = vmatpush1.bf16.msra.mxu0 %v562
    %767 = vmatprep.subr.bf16.mxu0 0
    %768 = vmatpush1.bf16.msra.mxu0 %v563
    %769 = vmatprep.subr.bf16.mxu0 0
    %770 = vmatpush1.bf16.msra.mxu0 %v564
    %771 = vmatprep.subr.bf16.mxu0 0
    %772 = vmatpush1.bf16.msra.mxu0 %v565
    %773 = vmatprep.subr.bf16.mxu0 0
    %774 = vmatpush1.bf16.msra.mxu0 %v566
    %775 = vmatprep.subr.bf16.mxu0 0
    %776 = vmatpush1.bf16.msra.mxu0 %v567
    %777 = vmatprep.subr.bf16.mxu0 0
    %778 = vmatpush1.bf16.msra.mxu0 %v568
    %779 = vmatprep.subr.bf16.mxu0 0
    %780 = vmatpush1.bf16.msra.mxu0 %v569
    %781 = vmatprep.subr.bf16.mxu0 0
    %782 = vmatpush1.bf16.msra.mxu0 %v570
    %783 = vmatprep.subr.bf16.mxu0 0
    %784 = vmatpush1.bf16.msra.mxu0 %v571
    %785 = vmatprep.subr.bf16.mxu0 0
    %786 = vmatpush1.bf16.msra.mxu0 %v572
    %787 = vmatprep.subr.bf16.mxu0 0
    %788 = vmatpush1.bf16.msra.mxu0 %v573
    %789 = vmatprep.subr.bf16.mxu0 0
    %790 = vmatpush1.bf16.msra.mxu0 %v574
    %791 = vmatprep.mubr.bf16.mxu0 %v122
    %792 = vmatmul.mubr.bf16.gmra.mrb[0].mxu0 %v121
    %v793 = vpop.f32.mrb[0].mxu0
    %v794 = vadd.f32 %v754, %v793
    %v795 = vpop.f32.mrb[0].mxu0
    %v796 = vpop.f32.mrb[0].mxu0
    %v797 = vpop.f32.mrb[0].mxu0
    %798 = vdwg.mxu0
    %v799 = vlaneseq
    %v800 = vshrl.u32 %v799, 7
    %v801 = vsub.s32 3, %v800
    %v802 = vrot.slane %v105, %v801
    %v803 = vsub.f32 %v794, %v802
    %v804 = vadd.f32 %v105, 1e-05
    %v805 = vrsqrt.pop %v804
    %v806 = vlaneseq
    %v807 = vshrl.u32 %v806, 7
    %v808 = vsub.s32 4, %v807
    %v809 = vrot.slane %v805, %v808
    %v810 = vmul.f32 %v803, %v809
    %v811 = vlaneseq
    %v812 = vshrl.u32 %v811, 7
    %v813 = vsub.s32 1, %v812
    %v814 = vrot.slane %v105, %v813
    %v815 = vmul.f32 %v810, %v814
    %v816 = vlaneseq
    %v817 = vshrl.u32 %v816, 7
    %v818 = vsub.s32 2, %v817
    %v819 = vrot.slane %v105, %v818
    %v820 = vadd.f32 %v815, %v819
    %vm821 = vcmp.gt.f32.partialorder %v820, 0.0
    %v822 = vmul.f32 %v820, 0.1
    %v823 = vsel %vm821, %v820, %v822
    %v824 = vpack.c.bf16 %v823, %v823
    %v825 = vld [vmem:[#allocation8] sm:$0xf]
    %v826 = vld [vmem:[#allocation8 + $0x4] sm:$0xf]
    %v827 = vld [vmem:[#allocation8 + $0x8] sm:$0xf]
    %v828 = vld [vmem:[#allocation8 + $0xc] sm:$0xf]
    %v829 = vld [vmem:[#allocation8 + $0x10] sm:$0xf]
    %v830 = vld [vmem:[#allocation8 + $0x14] sm:$0xf]
    %v831 = vld [vmem:[#allocation8 + $0x18] sm:$0xf]
    %v832 = vld [vmem:[#allocation8 + $0x1c] sm:$0xf]
    %v833 = vld [vmem:[#allocation8 + $0x20] sm:$0xf]
    %v834 = vld [vmem:[#allocation8 + $0x24] sm:$0xf]
    %v835 = vld [vmem:[#allocation8 + $0x28] sm:$0xf]
    %v836 = vld [vmem:[#allocation8 + $0x2c] sm:$0xf]
    %v837 = vld [vmem:[#allocation8 + $0x30] sm:$0xf]
    %v838 = vld [vmem:[#allocation8 + $0x34] sm:$0xf]
    %v839 = vld [vmem:[#allocation8 + $0x38] sm:$0xf]
    %v840 = vld [vmem:[#allocation8 + $0x3c] sm:$0xf]
    %v841 = vlaneseq
    %v842 = vshrl.u32 %v841, 7
    %v843 = vsub.s32 5, %v842
    %v844 = vrot.slane %v105, %v843
    %v861 = vunpack.c.l.b16 %v825
    %v862 = vunpack.c.l.b16 %v826
    %v863 = vunpack.c.l.b16 %v827
    %v864 = vunpack.c.l.b16 %v828
    %v865 = vunpack.c.l.b16 %v829
    %v866 = vunpack.c.l.b16 %v830
    %v867 = vunpack.c.l.b16 %v831
    %v868 = vunpack.c.l.b16 %v832
    %v869 = vunpack.c.l.b16 %v833
    %v870 = vunpack.c.l.b16 %v834
    %v871 = vunpack.c.l.b16 %v835
    %v872 = vunpack.c.l.b16 %v836
    %v873 = vunpack.c.l.b16 %v837
    %v874 = vunpack.c.l.b16 %v838
    %v875 = vunpack.c.l.b16 %v839
    %v876 = vunpack.c.l.b16 %v840
    %v877 = vpack.c.b16 %v862, %v861
    %v878 = vpack.c.b16 %v864, %v863
    %v879 = vpack.c.b16 %v866, %v865
    %v880 = vpack.c.b16 %v868, %v867
    %v881 = vpack.c.b16 %v870, %v869
    %v882 = vpack.c.b16 %v872, %v871
    %v883 = vpack.c.b16 %v874, %v873
    %v884 = vpack.c.b16 %v876, %v875
    %893 = vmatprep.subr.bf16.mxu0 0
    %894 = vmatpush1.bf16.msra.mxu0 %v877
    %895 = vmatprep.subr.bf16.mxu0 0
    %896 = vmatpush1.bf16.msra.mxu0 %v878
    %897 = vmatprep.subr.bf16.mxu0 0
    %898 = vmatpush1.bf16.msra.mxu0 %v879
    %899 = vmatprep.subr.bf16.mxu0 0
    %900 = vmatpush1.bf16.msra.mxu0 %v880
    %901 = vmatprep.subr.bf16.mxu0 0
    %902 = vmatpush1.bf16.msra.mxu0 %v881
    %903 = vmatprep.subr.bf16.mxu0 0
    %904 = vmatpush1.bf16.msra.mxu0 %v882
    %905 = vmatprep.subr.bf16.mxu0 0
    %906 = vmatpush1.bf16.msra.mxu0 %v883
    %907 = vmatprep.subr.bf16.mxu0 0
    %908 = vmatpush1.bf16.msra.mxu0 %v884
    %909 = vmatprep.subr.bf16.mxu0 0
    %910 = vmatpush1.bf16.msra.mxu0 0
    %911 = vmatprep.subr.bf16.mxu0 0
    %912 = vmatpush1.bf16.msra.mxu0 0
    %913 = vmatprep.subr.bf16.mxu0 0
    %914 = vmatpush1.bf16.msra.mxu0 0
    %915 = vmatprep.subr.bf16.mxu0 0
    %916 = vmatpush1.bf16.msra.mxu0 0
    %917 = vmatprep.subr.bf16.mxu0 0
    %918 = vmatpush1.bf16.msra.mxu0 0
    %919 = vmatprep.subr.bf16.mxu0 0
    %920 = vmatpush1.bf16.msra.mxu0 0
    %921 = vmatprep.subr.bf16.mxu0 0
    %922 = vmatpush1.bf16.msra.mxu0 0
    %923 = vmatprep.subr.bf16.mxu0 0
    %924 = vmatpush1.bf16.msra.mxu0 0
    %925 = vmatprep.mubr.bf16.mxu0 0
    %926 = vmatmul.mubr.bf16.gmra.mrb[0].mxu0 %v824
    %v927 = vpop.f32.mrb[0].mxu0
    %v928 = vadd.f32 %v844, %v927
    %v929 = vpop.f32.mrb[0].mxu0
    %v930 = vpop.f32.mrb[0].mxu0
    %v931 = vpop.f32.mrb[0].mxu0
    %932 = vdwg.mxu0
    %933 = vadd.xlane.f32.xlu0 %v928
    %v934 = vpop.xlane.xlu0 %933
    %v935 = vmul.f32 %v928, %v928
    %936 = vadd.xlane.f32.xlu0 %v935
    %v937 = vpop.xlane.xlu0 %936
    %v938 = vmul.f32 %v934, 0.015625
    %v939 = vmul.f32 %v937, 0.015625
    %v940 = vmul.f32 %v938, %v938
    %v941 = vsub.f32 %v939, %v940
    %v942 = vmax.f32 %v941, 0.0
    %v943 = vsub.f32 %v928, %v938
    %v944 = vadd.f32 %v942, 1e-05
    %v945 = vrsqrt.pop %v944
    %v946 = vmul.f32 %v943, %v945
    %v947 = vlaneseq
    %v948 = vshrl.u32 %v947, 7
    %v949 = vsub.s32 6, %v948
    %v950 = vrot.slane %v105, %v949
    %v951 = vmul.f32 %v946, %v950
    %v952 = vlaneseq
    %v953 = vshrl.u32 %v952, 7
    %v954 = vsub.s32 7, %v953
    %v955 = vrot.slane %v105, %v954
    %v956 = vadd.f32 %v951, %v955
    %v957 = vmax.f32 %v956, 0.0
    %v958 = vpack.c.bf16 %v957, %v957
    %v959 = vld [vmem:[#allocation10] sm:$0xf]
    %v960 = vld [vmem:[#allocation10 + $0x4] sm:$0xf]
    %v961 = vld [vmem:[#allocation10 + $0x8] sm:$0xf]
    %v962 = vld [vmem:[#allocation10 + $0xc] sm:$0xf]
    %v963 = vld [vmem:[#allocation10 + $0x10] sm:$0xf]
    %v964 = vld [vmem:[#allocation10 + $0x14] sm:$0xf]
    %v965 = vld [vmem:[#allocation10 + $0x18] sm:$0xf]
    %v966 = vld [vmem:[#allocation10 + $0x1c] sm:$0xf]
    %v967 = vld [vmem:[#allocation10 + $0x20] sm:$0xf]
    %v968 = vld [vmem:[#allocation10 + $0x24] sm:$0xf]
    %v969 = vld [vmem:[#allocation10 + $0x28] sm:$0xf]
    %v970 = vld [vmem:[#allocation10 + $0x2c] sm:$0xf]
    %v971 = vld [vmem:[#allocation10 + $0x30] sm:$0xf]
    %v972 = vld [vmem:[#allocation10 + $0x34] sm:$0xf]
    %v973 = vld [vmem:[#allocation10 + $0x38] sm:$0xf]
    %v974 = vld [vmem:[#allocation10 + $0x3c] sm:$0xf]
    %v975 = vlaneseq
    %v976 = vshrl.u32 %v975, 7
    %v977 = vsub.s32 0, %v976
    %v978 = vrot.slane %v106, %v977
    %v995 = vunpack.c.l.b16 %v959
    %v996 = vunpack.c.l.b16 %v960
    %v997 = vunpack.c.l.b16 %v961
    %v998 = vunpack.c.l.b16 %v962
    %v999 = vunpack.c.l.b16 %v963
    %v1000 = vunpack.c.l.b16 %v964
    %v1001 = vunpack.c.l.b16 %v965
    %v1002 = vunpack.c.l.b16 %v966
    %v1003 = vunpack.c.l.b16 %v967
    %v1004 = vunpack.c.l.b16 %v968
    %v1005 = vunpack.c.l.b16 %v969
    %v1006 = vunpack.c.l.b16 %v970
    %v1007 = vunpack.c.l.b16 %v971
    %v1008 = vunpack.c.l.b16 %v972
    %v1009 = vunpack.c.l.b16 %v973
    %v1010 = vunpack.c.l.b16 %v974
    %v1011 = vpack.c.b16 %v996, %v995
    %v1012 = vpack.c.b16 %v998, %v997
    %v1013 = vpack.c.b16 %v1000, %v999
    %v1014 = vpack.c.b16 %v1002, %v1001
    %v1015 = vpack.c.b16 %v1004, %v1003
    %v1016 = vpack.c.b16 %v1006, %v1005
    %v1017 = vpack.c.b16 %v1008, %v1007
    %v1018 = vpack.c.b16 %v1010, %v1009
    %1027 = vmatprep.subr.bf16.mxu0 0
    %1028 = vmatpush1.bf16.msra.mxu0 %v1011
    %1029 = vmatprep.subr.bf16.mxu0 0
    %1030 = vmatpush1.bf16.msra.mxu0 %v1012
    %1031 = vmatprep.subr.bf16.mxu0 0
    %1032 = vmatpush1.bf16.msra.mxu0 %v1013
    %1033 = vmatprep.subr.bf16.mxu0 0
    %1034 = vmatpush1.bf16.msra.mxu0 %v1014
    %1035 = vmatprep.subr.bf16.mxu0 0
    %1036 = vmatpush1.bf16.msra.mxu0 %v1015
    %1037 = vmatprep.subr.bf16.mxu0 0
    %1038 = vmatpush1.bf16.msra.mxu0 %v1016
    %1039 = vmatprep.subr.bf16.mxu0 0
    %1040 = vmatpush1.bf16.msra.mxu0 %v1017
    %1041 = vmatprep.subr.bf16.mxu0 0
    %1042 = vmatpush1.bf16.msra.mxu0 %v1018
    %1043 = vmatprep.subr.bf16.mxu0 0
    %1044 = vmatpush1.bf16.msra.mxu0 0
    %1045 = vmatprep.subr.bf16.mxu0 0
    %1046 = vmatpush1.bf16.msra.mxu0 0
    %1047 = vmatprep.subr.bf16.mxu0 0
    %1048 = vmatpush1.bf16.msra.mxu0 0
    %1049 = vmatprep.subr.bf16.mxu0 0
    %1050 = vmatpush1.bf16.msra.mxu0 0
    %1051 = vmatprep.subr.bf16.mxu0 0
    %1052 = vmatpush1.bf16.msra.mxu0 0
    %1053 = vmatprep.subr.bf16.mxu0 0
    %1054 = vmatpush1.bf16.msra.mxu0 0
    %1055 = vmatprep.subr.bf16.mxu0 0
    %1056 = vmatpush1.bf16.msra.mxu0 0
    %1057 = vmatprep.subr.bf16.mxu0 0
    %1058 = vmatpush1.bf16.msra.mxu0 0
    %1059 = vmatprep.mubr.bf16.mxu0 0
    %1060 = vmatmul.mubr.bf16.gmra.mrb[0].mxu0 %v958
    %v1061 = vpop.f32.mrb[0].mxu0
    %v1062 = vadd.f32 %v978, %v1061
    %v1063 = vpop.f32.mrb[0].mxu0
    %v1064 = vpop.f32.mrb[0].mxu0
    %v1065 = vpop.f32.mrb[0].mxu0
    %1066 = vdwg.mxu0
    %1067 = vadd.xlane.f32.xlu0 %v1062
    %v1068 = vpop.xlane.xlu0 %1067
    %v1069 = vmul.f32 %v1062, %v1062
    %1070 = vadd.xlane.f32.xlu0 %v1069
    %v1071 = vpop.xlane.xlu0 %1070
    %v1072 = vmul.f32 %v1068, 0.03125
    %v1073 = vmul.f32 %v1071, 0.03125
    %v1074 = vmul.f32 %v1072, %v1072
    %v1075 = vsub.f32 %v1073, %v1074
    %v1076 = vmax.f32 %v1075, 0.0
    %v1077 = vsub.f32 %v1062, %v1072
    %v1078 = vadd.f32 %v1076, 1e-05
    %v1079 = vrsqrt.pop %v1078
    %v1080 = vmul.f32 %v1077, %v1079
    %v1081 = vlaneseq
    %v1082 = vshrl.u32 %v1081, 7
    %v1083 = vsub.s32 1, %v1082
    %v1084 = vrot.slane %v106, %v1083
    %v1085 = vmul.f32 %v1080, %v1084
    %v1086 = vlaneseq
    %v1087 = vshrl.u32 %v1086, 7
    %v1088 = vsub.s32 2, %v1087
    %v1089 = vrot.slane %v106, %v1088
    %v1090 = vadd.f32 %v1085, %v1089
    %v1091 = vmax.f32 %v1090, 0.0
    %v1092 = vpack.c.bf16 %v1091, %v1091
    %v1093 = vld [vmem:[#allocation11] sm:$0xf]
    %v1094 = vld [vmem:[#allocation11 + $0x4] sm:$0xf]
    %v1095 = vld [vmem:[#allocation11 + $0x8] sm:$0xf]
    %v1096 = vld [vmem:[#allocation11 + $0xc] sm:$0xf]
    %v1097 = vld [vmem:[#allocation11 + $0x10] sm:$0xf]
    %v1098 = vld [vmem:[#allocation11 + $0x14] sm:$0xf]
    %v1099 = vld [vmem:[#allocation11 + $0x18] sm:$0xf]
    %v1100 = vld [vmem:[#allocation11 + $0x1c] sm:$0xf]
    %v1101 = vld [vmem:[#allocation11 + $0x20] sm:$0xf]
    %v1102 = vld [vmem:[#allocation11 + $0x24] sm:$0xf]
    %v1103 = vld [vmem:[#allocation11 + $0x28] sm:$0xf]
    %v1104 = vld [vmem:[#allocation11 + $0x2c] sm:$0xf]
    %v1105 = vld [vmem:[#allocation11 + $0x30] sm:$0xf]
    %v1106 = vld [vmem:[#allocation11 + $0x34] sm:$0xf]
    %v1107 = vld [vmem:[#allocation11 + $0x38] sm:$0xf]
    %v1108 = vld [vmem:[#allocation11 + $0x3c] sm:$0xf]
    %v1109 = vlaneseq
    %v1110 = vshrl.u32 %v1109, 7
    %v1111 = vsub.s32 3, %v1110
    %v1112 = vrot.slane %v106, %v1111
    %v1129 = vunpack.c.l.b16 %v1093
    %v1130 = vunpack.c.l.b16 %v1094
    %v1131 = vunpack.c.l.b16 %v1095
    %v1132 = vunpack.c.l.b16 %v1096
    %v1133 = vunpack.c.l.b16 %v1097
    %v1134 = vunpack.c.l.b16 %v1098
    %v1135 = vunpack.c.l.b16 %v1099
    %v1136 = vunpack.c.l.b16 %v1100
    %v1137 = vunpack.c.l.b16 %v1101
    %v1138 = vunpack.c.l.b16 %v1102
    %v1139 = vunpack.c.l.b16 %v1103
    %v1140 = vunpack.c.l.b16 %v1104
    %v1141 = vunpack.c.l.b16 %v1105
    %v1142 = vunpack.c.l.b16 %v1106
    %v1143 = vunpack.c.l.b16 %v1107
    %v1144 = vunpack.c.l.b16 %v1108
    %v1145 = vpack.c.b16 %v1130, %v1129
    %v1146 = vpack.c.b16 %v1132, %v1131
    %v1147 = vpack.c.b16 %v1134, %v1133
    %v1148 = vpack.c.b16 %v1136, %v1135
    %v1149 = vpack.c.b16 %v1138, %v1137
    %v1150 = vpack.c.b16 %v1140, %v1139
    %v1151 = vpack.c.b16 %v1142, %v1141
    %v1152 = vpack.c.b16 %v1144, %v1143
    %1161 = vmatprep.subr.bf16.mxu0 0
    %1162 = vmatpush1.bf16.msra.mxu0 %v1145
    %1163 = vmatprep.subr.bf16.mxu0 0
    %1164 = vmatpush1.bf16.msra.mxu0 %v1146
    %1165 = vmatprep.subr.bf16.mxu0 0
    %1166 = vmatpush1.bf16.msra.mxu0 %v1147
    %1167 = vmatprep.subr.bf16.mxu0 0
    %1168 = vmatpush1.bf16.msra.mxu0 %v1148
    %1169 = vmatprep.subr.bf16.mxu0 0
    %1170 = vmatpush1.bf16.msra.mxu0 %v1149
    %1171 = vmatprep.subr.bf16.mxu0 0
    %1172 = vmatpush1.bf16.msra.mxu0 %v1150
    %1173 = vmatprep.subr.bf16.mxu0 0
    %1174 = vmatpush1.bf16.msra.mxu0 %v1151
    %1175 = vmatprep.subr.bf16.mxu0 0
    %1176 = vmatpush1.bf16.msra.mxu0 %v1152
    %1177 = vmatprep.subr.bf16.mxu0 0
    %1178 = vmatpush1.bf16.msra.mxu0 0
    %1179 = vmatprep.subr.bf16.mxu0 0
    %1180 = vmatpush1.bf16.msra.mxu0 0
    %1181 = vmatprep.subr.bf16.mxu0 0
    %1182 = vmatpush1.bf16.msra.mxu0 0
    %1183 = vmatprep.subr.bf16.mxu0 0
    %1184 = vmatpush1.bf16.msra.mxu0 0
    %1185 = vmatprep.subr.bf16.mxu0 0
    %1186 = vmatpush1.bf16.msra.mxu0 0
    %1187 = vmatprep.subr.bf16.mxu0 0
    %1188 = vmatpush1.bf16.msra.mxu0 0
    %1189 = vmatprep.subr.bf16.mxu0 0
    %1190 = vmatpush1.bf16.msra.mxu0 0
    %1191 = vmatprep.subr.bf16.mxu0 0
    %1192 = vmatpush1.bf16.msra.mxu0 0
    %1193 = vmatprep.mubr.bf16.mxu0 0
    %1194 = vmatmul.mubr.bf16.gmra.mrb[0].mxu0 %v1092
    %v1195 = vpop.f32.mrb[0].mxu0
    %v1196 = vadd.f32 %v1112, %v1195
    %v1197 = vpop.f32.mrb[0].mxu0
    %v1198 = vpop.f32.mrb[0].mxu0
    %v1199 = vpop.f32.mrb[0].mxu0
    %1200 = vdwg.mxu0
    %1201 = vst [vmem:[#allocation13] sm:$0xff] %v1196
    // Predicated region
    $region50: #{tpu_custom_call.1} parent=1 // pred_check
      _
    $region51: #{tpu_custom_call.1} parent=1 // pred_check_branch
      %1203 = sbr.rel (0) target = $region53
    $region52: #{tpu_custom_call.1} parent=1 // pred_region
      %s1205 = ssub.s32 128, 128
      %1206 = vsyncadd [#allocation4], %s1205
      %s1208 = sshll.u32 [#allocation13], 4
      %s1209 = int_to_ptr.vmem [resolvable:$true] %s1208
      %1211 = dma.vmem_to_hbm [thread:$0]  %s1209, 128, %s6, [#allocation4]
    $region53: #{tpu_custom_call.1} parent=1 // pred_fallthru
      _
    // Predicated region
    $region54: #{tpu_custom_call.1} parent=1 // pred_check
      _
    $region55: #{tpu_custom_call.1} parent=1 // pred_check_branch
      %1213 = sbr.rel (0) target = $region57
    $region56: #{tpu_custom_call.1} parent=1 // pred_region
      %1214 = dma.done [#allocation4], 128
    $region57: #{tpu_custom_call.1} parent=1 // pred_fallthru
      _
    %1215 = vsyncpa [#allocation3], 1
    %1216 = vsyncpa [#allocation6], 1
    %1217 = vsyncpa [#allocation9], 1
    %1218 = vsyncpa [#allocation12], 1
    %1219 = vsyncpa [#allocation4], 1

</llo_original>
